<compile_context>
chip_gen: v7x
topology: tpu7x:2x2x1
jax: 0.10.0
libtpu: 0.0.40
codegen_flags: <defaults>
</compile_context>

<pallas_src>
import jax
import jax.numpy as jnp
from jax.experimental import pallas as pl
from jax.experimental.pallas import tpu as pltpu


def _round_up(v, m):
    return (v + m - 1) // m * m


def _divergence_kernel(main_ref, halo_ref, out_ref):
    """One row-tile of the divergence.

    main_ref : (2, TH, Wp) f32   zero-padded planes, padded rows [i*TH, (i+1)*TH)
    halo_ref : (2, 1, 8, Wp) f32 next padded rows (only the first 2 are real)
    out_ref  : (TH, W) f32       output rows [i*TH, (i+1)*TH)
    """
    th = main_ref.shape[1]
    w = out_ref.shape[1]

    xh = main_ref[0]                                  # (TH, Wp) channel 0
    xv = main_ref[1]                                  # (TH, Wp) channel 1
    hh = halo_ref[0, 0]                               # (8, Wp) bottom halo ch0
    hv = halo_ref[1, 0]                               # (8, Wp) bottom halo ch1

    # Extend each plane by its bottom halo (sublane-aligned concat).
    xh_ext = jnp.concatenate([xh, hh], axis=0)        # (TH+8, Wp)
    xv_ext = jnp.concatenate([xv, hv], axis=0)        # (TH+8, Wp)

    # Vertical (sublane-direction) separable passes — no multiplies needed.
    mid = xh_ext[1:th + 1]
    s = xh_ext[0:th] + (mid + mid) + xh_ext[2:th + 2]   # [1,2,1] smoothing, ch0
    d = xv_ext[0:th] - xv_ext[2:th + 2]                 # [1,0,-1] difference, ch1

    # Horizontal (lane-direction) pass: out[:, j] = (s+d)[:, j] + 2*d[:, j+1]
    #                                              + (d-s)[:, j+2]
    a = s + d
    b = d - s
    d1 = d[:, 1:w + 1]
    out_ref[...] = a[:, 0:w] + (d1 + d1) + b[:, 2:w + 2]


def divergence(x, tile_rows=None):
    """Pallas equivalent of Divergence.forward.

    :param x: (H, W, 2) vector field.
    :return: (H, W) float32 divergence.
    """
    h, w, c = x.shape
    assert c == 2

    wp = _round_up(w + 2, 128)                         # lane-aligned padded width

    if tile_rows is None:
        # Keep ~12 live (TH, Wp) f32 slabs (double-buffered inputs, temporaries,
        # output) under ~24 MiB -> headroom under every generation's VMEM limit.
        budget = max(8, ((24 * 1024 * 1024) // (12 * 4 * wp)) // 8 * 8)
        tile_rows = min(256, _round_up(h, 8), budget)
    th = max(8, _round_up(int(tile_rows), 8))
    nt = pl.cdiv(h, th)

    # One fused transpose+pad: planes (2, nt*TH, Wp) with a 1-px zero border
    # (top/left) folded in.  Padded row r holds x[r-1]; padded col c holds
    # x[:, c-1].
    xf = jnp.moveaxis(x.astype(jnp.float32), -1, 0)    # (2, H, W)
    rows_keep = min(h, nt * th - 1)
    main = jnp.pad(xf[:, :rows_keep, :],
                   ((0, 0), (1, nt * th - 1 - rows_keep), (1, wp - w - 1)))

    # Tiny bottom-halo sidecar: for tile i, padded rows (i+1)*TH and (i+1)*TH+1
    # (zero outside the image), padded to 8 sublanes for aligned blocks.
    hrow = jnp.arange(1, nt + 1)[:, None] * th + jnp.arange(2)[None, :] - 1
    valid = hrow < h
    halo = jnp.where(valid[None, :, :, None],
                     xf[:, jnp.clip(hrow, 0, h - 1), :], 0.0)   # (2, nt, 2, W)
    halo = jnp.pad(halo, ((0, 0), (0, 0), (0, 6), (1, wp - w - 1)))  # (2,nt,8,Wp)

    return pl.pallas_call(
        _divergence_kernel,
        out_shape=jax.ShapeDtypeStruct((h, w), jnp.float32),
        grid=(nt,),
        in_specs=[
            pl.BlockSpec((2, th, wp), lambda i: (0, i, 0)),
            pl.BlockSpec((2, 1, 8, wp), lambda i: (0, i, 0, 0)),
        ],
        out_specs=pl.BlockSpec((th, w), lambda i: (i, 0)),
        compiler_params=pltpu.CompilerParams(
            dimension_semantics=("parallel",),
            vmem_limit_bytes=48 * 1024 * 1024,
        ),
    )(main, halo)


def _reference(x):
    """Pure-JAX reference replicating F.conv2d(padding=1) cross-correlation."""
    conv_h = jnp.array([[1., 0., -1.], [2., 0., -2.], [1., 0., -1.]],
                       dtype=jnp.float32).reshape(1, 1, 3, 3)
    conv_v = jnp.array([[1., 2., 1.], [0., 0., 0.], [-1., -2., -1.]],
                       dtype=jnp.float32).reshape(1, 1, 3, 3)

    def conv(plane, wgt):
        out = jax.lax.conv_general_dilated(
            plane[None, None].astype(jnp.float32), wgt, (1, 1),
            ((1, 1), (1, 1)), dimension_numbers=("NCHW", "OIHW", "NCHW"))
        return out[0, 0]

    return conv(x[..., 0], conv_h) + conv(x[..., 1], conv_v)


if __name__ == "__main__":
    key = jax.random.PRNGKey(0)

    # Primary small case from the module spec: (H, W, 2) vector field.
    x = jax.random.normal(key, (16, 16, 2), dtype=jnp.float32)
    out = divergence(x)
    jax.block_until_ready(out)
    assert out.shape == (16, 16)
    assert jnp.allclose(out, _reference(x), atol=1e-4, rtol=1e-4), "mismatch (16x16)"

    # Extra small cases exercising multi-tile grids, halos and masked edges.
    for (h2, w2), tr in (((48, 24), 16), ((33, 20), 8)):
        key, sub = jax.random.split(key)
        xi = jax.random.normal(sub, (h2, w2, 2), dtype=jnp.float32)
        oi = divergence(xi, tile_rows=tr)
        jax.block_until_ready(oi)
        assert oi.shape == (h2, w2)
        assert jnp.allclose(oi, _reference(xi), atol=1e-4, rtol=1e-4), \
            f"mismatch ({h2}x{w2}, tile_rows={tr})"

    print("KERNEL_OK")
</pallas_src>

<mosaic_0001>
module attributes {stable_mosaic.version = 11 : i64} {
  func.func @_divergence_kernel(%arg0: i32, %arg1: memref<2x16x128xf32, #tpu.memory_space<vmem>>, %arg2: memref<2x1x8x128xf32, #tpu.memory_space<vmem>>, %arg3: memref<16x16xf32, #tpu.memory_space<vmem>>) attributes {dimension_semantics = [#tpu.dimension_semantics<parallel>], iteration_bounds = array<i64: 1>, scalar_prefetch = 0 : i64, scratch_operands = 0 : i64, tpu.core_type = #tpu.core_type<tc>, window_params = [{transform_indices = @transform_0, window_bounds = array<i64: 2, 16, 128>}, {transform_indices = @transform_1, window_bounds = array<i64: 2, 1, 8, 128>}, {transform_indices = @transform_2, window_bounds = array<i64: 16, 16>}]} {
    %c0 = arith.constant 0 : index
    %c0_0 = arith.constant 0 : index
    %c0_1 = arith.constant 0 : index
    %0 = vector.load %arg1[%c0, %c0_0, %c0_1] : memref<2x16x128xf32, #tpu.memory_space<vmem>>, vector<1x16x128xf32>
    %1 = vector.shape_cast %0 : vector<1x16x128xf32> to vector<16x128xf32>
    %c1 = arith.constant 1 : index
    %c0_2 = arith.constant 0 : index
    %c0_3 = arith.constant 0 : index
    %2 = vector.load %arg1[%c1, %c0_2, %c0_3] : memref<2x16x128xf32, #tpu.memory_space<vmem>>, vector<1x16x128xf32>
    %3 = vector.shape_cast %2 : vector<1x16x128xf32> to vector<16x128xf32>
    %c0_4 = arith.constant 0 : index
    %c0_5 = arith.constant 0 : index
    %c0_6 = arith.constant 0 : index
    %c0_7 = arith.constant 0 : index
    %4 = vector.load %arg2[%c0_4, %c0_5, %c0_6, %c0_7] : memref<2x1x8x128xf32, #tpu.memory_space<vmem>>, vector<1x1x8x128xf32>
    %5 = vector.shape_cast %4 : vector<1x1x8x128xf32> to vector<8x128xf32>
    %c1_8 = arith.constant 1 : index
    %c0_9 = arith.constant 0 : index
    %c0_10 = arith.constant 0 : index
    %c0_11 = arith.constant 0 : index
    %6 = vector.load %arg2[%c1_8, %c0_9, %c0_10, %c0_11] : memref<2x1x8x128xf32, #tpu.memory_space<vmem>>, vector<1x1x8x128xf32>
    %7 = vector.shape_cast %6 : vector<1x1x8x128xf32> to vector<8x128xf32>
    %8 = tpu.concatenate %1, %5 in 0 : vector<16x128xf32>, vector<8x128xf32> -> vector<24x128xf32>
    %9 = tpu.concatenate %3, %7 in 0 : vector<16x128xf32>, vector<8x128xf32> -> vector<24x128xf32>
    %10 = vector.extract_strided_slice %8 {offsets = [1, 0], sizes = [16, 128], strides = [1, 1]} : vector<24x128xf32> to vector<16x128xf32>
    %11 = vector.extract_strided_slice %8 {offsets = [0, 0], sizes = [16, 128], strides = [1, 1]} : vector<24x128xf32> to vector<16x128xf32>
    %12 = arith.addf %10, %10 : vector<16x128xf32>
    %13 = arith.addf %11, %12 : vector<16x128xf32>
    %14 = vector.extract_strided_slice %8 {offsets = [2, 0], sizes = [16, 128], strides = [1, 1]} : vector<24x128xf32> to vector<16x128xf32>
    %15 = arith.addf %13, %14 : vector<16x128xf32>
    %16 = vector.extract_strided_slice %9 {offsets = [0, 0], sizes = [16, 128], strides = [1, 1]} : vector<24x128xf32> to vector<16x128xf32>
    %17 = vector.extract_strided_slice %9 {offsets = [2, 0], sizes = [16, 128], strides = [1, 1]} : vector<24x128xf32> to vector<16x128xf32>
    %18 = arith.subf %16, %17 : vector<16x128xf32>
    %19 = arith.addf %15, %18 : vector<16x128xf32>
    %20 = arith.subf %18, %15 : vector<16x128xf32>
    %21 = vector.extract_strided_slice %18 {offsets = [0, 1], sizes = [16, 16], strides = [1, 1]} : vector<16x128xf32> to vector<16x16xf32>
    %22 = vector.extract_strided_slice %19 {offsets = [0, 0], sizes = [16, 16], strides = [1, 1]} : vector<16x128xf32> to vector<16x16xf32>
    %23 = arith.addf %21, %21 : vector<16x16xf32>
    %24 = arith.addf %22, %23 : vector<16x16xf32>
    %25 = vector.extract_strided_slice %20 {offsets = [0, 2], sizes = [16, 16], strides = [1, 1]} : vector<16x128xf32> to vector<16x16xf32>
    %26 = arith.addf %24, %25 : vector<16x16xf32>
    %c0_12 = arith.constant 0 : index
    %c0_13 = arith.constant 0 : index
    %27 = vector.load %arg3[%c0_12, %c0_13] : memref<16x16xf32, #tpu.memory_space<vmem>>, vector<16x16xf32>
    tpu.vector_store %arg3[%c0_12, %c0_13], %26 {strides = array<i32>} : memref<16x16xf32, #tpu.memory_space<vmem>>, vector<16x16xf32>,
    return
  }
  func.func @transform_0(%arg0: i32) -> (i32, i32, i32) {
    %c0_i32 = arith.constant 0 : i32
    %c0_i32_0 = arith.constant 0 : i32
    %c0_i32_1 = arith.constant 0 : i32
    return %c0_i32, %arg0, %c0_i32_0 : i32, i32, i32
  }
  func.func @transform_1(%arg0: i32) -> (i32, i32, i32, i32) {
    %c0_i32 = arith.constant 0 : i32
    %c0_i32_0 = arith.constant 0 : i32
    %c0_i32_1 = arith.constant 0 : i32
    %c0_i32_2 = arith.constant 0 : i32
    return %c0_i32, %arg0, %c0_i32_0, %c0_i32_1 : i32, i32, i32, i32
  }
  func.func @transform_2(%arg0: i32) -> (i32, i32) {
    %c0_i32 = arith.constant 0 : i32
    %c0_i32_0 = arith.constant 0 : i32
    return %arg0, %c0_i32 : i32, i32
  }
}

</mosaic_0001>

<llo_original>
// kernel: tpu_custom_call.1
$region0: #{tpu_custom_call.1}
  #allocation0 [shape = 'u32[]', space=smem, size = 0x4, offset = 0x4, fixed_abs, tag = 'smem constant byte address 0x4 - core index']
  #allocation1 [shape = 'u32[144,128]{1,0:T(1,128)}', space=vmem, size = 0x12000, scoped, tag = 'internal scratch']
  %s0 = inlined_call_operand.hbm [shape: f32[2,16,128], index: 0, kind: input, shape index: {}]
  %s1 = inlined_call_operand.hbm [shape: f32[2,1,8,128], index: 1, kind: input, shape index: {}]
  %s2 = inlined_call_operand.hbm [shape: f32[16,16], index: 2, kind: output, shape index: {}]
  %s3 = sld [smem:[#allocation0]]
  $region26: #{tpu_custom_call.1} parent=0
    _
  %s5 = ssub.s32 1, %s3
  %s6 = scalar_select 0, %s5, %s3
  $region1: #{tpu_custom_call.1} parent=0
    #allocation2 [shape = 'u8[16384]{0}', space=vmem, size = 0x4000, scoped, tag = 'input window, operand 0, single buffered']
    #allocation3 [shape = 's32[1]{0}', space=sflag, size = 0x4, scoped, tag = 'scoped memory for tpu_custom_call.1']
    #allocation4 [shape = 's32[1]{0}', space=sflag, size = 0x4, scoped, tag = 'scoped memory for tpu_custom_call.1']
    #allocation5 [shape = 'u8[8192]{0}', space=vmem, size = 0x2000, scoped, tag = 'input window, operand 1, single buffered']
    #allocation6 [shape = 's32[1]{0}', space=sflag, size = 0x4, scoped, tag = 'scoped memory for tpu_custom_call.1']
    #allocation7 [shape = 'u8[8192]{0}', space=vmem, size = 0x2000, scoped, tag = 'output window, operand 0, single buffered']
    %7 = vsyncpa [#allocation3], 0
    %8 = vsyncpa [#allocation6], 0
    %9 = vsyncpa [#allocation4], 0
    // Predicated region
    $region2: #{tpu_custom_call.1} parent=1 // pred_check
      _
    $region3: #{tpu_custom_call.1} parent=1 // pred_check_branch
      %11 = sbr.rel (0) target = $region5
    $region4: #{tpu_custom_call.1} parent=1 // pred_region
      %s13 = ssub.s32 512, 512
      %14 = vsyncadd [#allocation3], %s13
      %s15 = sshll.u32 [#allocation2], 4
      %s16 = int_to_ptr.vmem [resolvable:$true] %s15
      %21 = dma.hbm_to_vmem [thread:$0]  %s0, 512, %s16, [#allocation3], 128, 128, 8
    $region5: #{tpu_custom_call.1} parent=1 // pred_fallthru
      _
    // Predicated region
    $region6: #{tpu_custom_call.1} parent=1 // pred_check
      _
    $region7: #{tpu_custom_call.1} parent=1 // pred_check_branch
      %23 = sbr.rel (0) target = $region9
    $region8: #{tpu_custom_call.1} parent=1 // pred_region
      %s25 = ssub.s32 256, 256
      %26 = vsyncadd [#allocation6], %s25
      %s27 = sshll.u32 [#allocation5], 4
      %s28 = int_to_ptr.vmem [resolvable:$true] %s27
      %33 = dma.hbm_to_vmem [thread:$0]  %s1, 256, %s28, [#allocation6], 128, 128, 8
    $region9: #{tpu_custom_call.1} parent=1 // pred_fallthru
      _
    // Predicated region
    $region10: #{tpu_custom_call.1} parent=1 // pred_check
      _
    $region11: #{tpu_custom_call.1} parent=1 // pred_check_branch
      %35 = sbr.rel (0) target = $region13
    $region12: #{tpu_custom_call.1} parent=1 // pred_region
      %36 = dma.done [#allocation3], 512
    $region13: #{tpu_custom_call.1} parent=1 // pred_fallthru
      _
    // Predicated region
    $region14: #{tpu_custom_call.1} parent=1 // pred_check
      _
    $region15: #{tpu_custom_call.1} parent=1 // pred_check_branch
      %38 = sbr.rel (0) target = $region17
    $region16: #{tpu_custom_call.1} parent=1 // pred_region
      %39 = dma.done [#allocation6], 256
    $region17: #{tpu_custom_call.1} parent=1 // pred_fallthru
      _
    %v40 = vld [vmem:[#allocation2] sm:$0xff]
    %v41 = vld [vmem:[#allocation2 + $0x8] sm:$0xff]
    %s42 = scalar_lea.vmem [#allocation2], 16
    %v43 = vld [vmem:[%s42] sm:$0xff]
    %v44 = vld [vmem:[%s42 + $0x8] sm:$0xff]
    %v45 = vld [vmem:[#allocation5] sm:$0xff]
    %s46 = scalar_lea.vmem [#allocation5], 8
    %v47 = vld [vmem:[%s46] sm:$0xff]
    %v48 = vadd.f32 %v40, %v40
    %v49 = vadd.f32 %v41, %v41
    %v50 = vadd.f32 %v45, %v45
    %vm54 = vcmask 1046528
    %v55 = vrot.slane %v48, 1
    %v56 = vrot.slane %v49, 1
    %v57 = vsel %vm54, %v55, %v56
    %v58 = vrot.slane %v50, 1
    %v59 = vsel %vm54, %v56, %v58
    %v62 = vadd.f32 %v40, %v57
    %v63 = vadd.f32 %v41, %v59
    %vm67 = vcmask 1045504
    %v68 = vrot.slane %v40, 2
    %v69 = vrot.slane %v41, 2
    %v70 = vsel %vm67, %v68, %v69
    %v71 = vrot.slane %v45, 2
    %v72 = vsel %vm67, %v69, %v71
    %v75 = vadd.f32 %v62, %v70
    %v76 = vadd.f32 %v63, %v72
    %v80 = vrot.slane %v43, 2
    %v81 = vrot.slane %v44, 2
    %v82 = vsel %vm67, %v80, %v81
    %v83 = vrot.slane %v47, 2
    %v84 = vsel %vm67, %v81, %v83
    %v87 = vsub.f32 %v43, %v82
    %v88 = vsub.f32 %v44, %v84
    %v89 = vadd.f32 %v75, %v87
    %v90 = vadd.f32 %v76, %v88
    %v91 = vsub.f32 %v87, %v75
    %v92 = vsub.f32 %v88, %v76
    %v93 = vadd.f32 %v87, %v87
    %v94 = vadd.f32 %v88, %v88
    %97 = vrot.lane.b32.xlu0 %v93, 127
    %v98 = vpop.permute.xlu0 %97
    %99 = vrot.lane.b32.xlu0 %v94, 127
    %v100 = vpop.permute.xlu0 %99
    %v103 = vadd.f32 %v89, %v98
    %v104 = vadd.f32 %v90, %v100
    %107 = vrot.lane.b32.xlu0 %v91, 126
    %v108 = vpop.permute.xlu0 %107
    %109 = vrot.lane.b32.xlu0 %v92, 126
    %v110 = vpop.permute.xlu0 %109
    %v113 = vadd.f32 %v103, %v108
    %v114 = vadd.f32 %v104, %v110
    %vm115 = vcmask 130048
    %116 = vst.msk [vmem:[#allocation7] sm:$0xff] %vm115, %v113
    %117 = vst.msk [vmem:[#allocation7 + $0x8] sm:$0xff] %vm115, %v114
    // Predicated region
    $region18: #{tpu_custom_call.1} parent=1 // pred_check
      _
    $region19: #{tpu_custom_call.1} parent=1 // pred_check_branch
      %119 = sbr.rel (0) target = $region21
    $region20: #{tpu_custom_call.1} parent=1 // pred_region
      %s121 = ssub.s32 256, 256
      %122 = vsyncadd [#allocation4], %s121
      %s123 = sshll.u32 [#allocation7], 4
      %s124 = int_to_ptr.vmem [resolvable:$true] %s123
      %129 = dma.vmem_to_hbm [thread:$0]  %s124, 256, %s2, [#allocation4], 128, 128, 8
    $region21: #{tpu_custom_call.1} parent=1 // pred_fallthru
      _
    // Predicated region
    $region22: #{tpu_custom_call.1} parent=1 // pred_check
      _
    $region23: #{tpu_custom_call.1} parent=1 // pred_check_branch
      %131 = sbr.rel (0) target = $region25
    $region24: #{tpu_custom_call.1} parent=1 // pred_region
      %132 = dma.done [#allocation4], 256
    $region25: #{tpu_custom_call.1} parent=1 // pred_fallthru
      _
    %133 = vsyncpa [#allocation3], 1
    %134 = vsyncpa [#allocation6], 1
    %135 = vsyncpa [#allocation4], 1

</llo_original>
